<compile_context>
chip_gen: v7x
topology: tpu7x:2x2x1
jax: 0.10.0
libtpu: 0.0.40
codegen_flags: <defaults>
</compile_context>

<pallas_src>
import math
from functools import partial

import jax
import jax.numpy as jnp
from jax.experimental import pallas as pl
from jax.experimental.pallas import tpu as pltpu

_HALF_LOG_2PI = 0.5 * math.log(2.0 * math.pi)


def _elbo_kernel(p_loc_ref, p_scale_ref, y_ref,
                 qc_loc_ref, qc_scale_ref, qt_loc_ref, qt_scale_ref,
                 out_ref, acc_ref, *, beta, n_z, batch, n_lat, g_z, logp_const):
    """Grid: axis 0 = column tiles of the flattened T*Dy axis (outer),
             axis 1 = z-groups of size g_z (inner).

    p_loc_ref / p_scale_ref : [g_z*B, tC]  VMEM (native dtype)
    y_ref                   : [B, tC]      VMEM (re-used across z-groups)
    q*_ref                  : [B, L*Dz]    VMEM (full, constant block index)
    out_ref                 : [3]          SMEM f32 (loss, kl, nll means)
    acc_ref                 : [g_z*B, tC]  VMEM f32 accumulator (scratch)
    """
    c = pl.program_id(0)
    g = pl.program_id(1)
    nc = pl.num_programs(0)
    ng = pl.num_programs(1)

    @pl.when(jnp.logical_and(c == 0, g == 0))
    def _init():
        acc_ref[...] = jnp.zeros_like(acc_ref)

    mu = p_loc_ref[...].astype(jnp.float32)      # [g_z*B, tC]
    sg = p_scale_ref[...].astype(jnp.float32)    # [g_z*B, tC]
    yt = y_ref[...].astype(jnp.float32)          # [B, tC]
    if g_z > 1:
        yt = jnp.concatenate([yt] * g_z, axis=0)  # replicate across z-group

    # 1/sigma: approx reciprocal on the EUP + one Newton step on the VPU
    # (full f32 accuracy, leaves the EUP slot mostly to jnp.log).
    r = pl.reciprocal(sg, approx=True)
    inv_sg = r * (2.0 - sg * r)
    d = (yt - mu) * inv_sg
    # Gaussian log-density without the -0.5*log(2*pi) constant (folded in
    # once at finalization via logp_const).
    acc_ref[...] += -0.5 * (d * d) - jnp.log(sg)

    @pl.when(jnp.logical_and(c == nc - 1, g == ng - 1))
    def _finalize():
        # KL(q_zCct || q_zCc) for diagonal Gaussians (q_zCct first arg).
        m1 = qt_loc_ref[...].astype(jnp.float32)
        s1 = qt_scale_ref[...].astype(jnp.float32)
        m2 = qc_loc_ref[...].astype(jnp.float32)
        s2 = qc_scale_ref[...].astype(jnp.float32)
        ratio = s1 / s2
        dm = (m1 - m2) / s2
        kl_elem = 0.5 * (ratio * ratio + dm * dm) - jnp.log(ratio) - 0.5
        total_kl = jnp.sum(kl_elem)

        total_logp = jnp.sum(acc_ref[...]) - logp_const

        # reduction == 'mean'
        out_ref[0] = (beta * total_kl - total_logp / n_z) / batch   # mean loss
        out_ref[1] = total_kl / (batch * n_lat)                     # mean kl_z
        out_ref[2] = -total_logp / (n_z * batch)                    # mean NLL


def _pick_group(n_z, batch, itemsize):
    """Number of z per step so rows = g*B fills sublanes (8/16/32 by dtype)."""
    sub = {4: 8, 2: 16, 1: 32}.get(itemsize, 8)
    if batch % sub == 0:
        return 1
    for g in range(1, n_z + 1):
        if n_z % g == 0 and (g * batch) % sub == 0:
            return g
    # Fallback: rows == n_z*B == full array dim (always a legal block dim).
    return n_z


def _pick_col_tile(td_padded, rows, batch, itemsize, budget_bytes):
    """Largest 128-multiple column tile dividing td_padded within the budget."""
    # Per-column VMEM bytes: double-buffered p_loc/p_scale + y + f32 acc.
    per_col = (2 * 2 * rows + 2 * batch) * itemsize + 4 * rows
    cap = max(128, (budget_bytes // per_col) // 128 * 128)
    t = min(td_padded, cap)
    t = max(128, (t // 128) * 128)
    while t > 128 and td_padded % t != 0:
        t -= 128
    if td_padded % t != 0:
        t = 128  # 128 always divides td_padded (a multiple of 128)
    return t


def elbo_loss(p_loc, p_scale, y_target, qc_loc, qc_scale, qt_loc, qt_scale,
              beta=1.0, vmem_budget_bytes=24 << 20):
    """Returns (mean(loss), mean(kl_z), mean(negative_ll)) as f32 scalars.

    p_loc, p_scale   : [n_z, B, T, Dy]   (any float dtype; kept native in HBM)
    y_target         : [B, T, Dy]        (a pre-broadcast 4-D y is tolerated)
    q*_loc, q*_scale : [B, L, Dz]
    """
    n_z, B, T, Dy = p_loc.shape
    _, L, Dz = qc_loc.shape

    if y_target.ndim == 4:          # tolerate a pre-broadcast [n_z, B, T, Dy]
        y_target = y_target[0]

    TD = T * Dy
    LD = L * Dz
    itemsize = p_loc.dtype.itemsize

    # Flatten: p -> [n_z*B, TD] (z-major rows), y -> [B, TD], q -> [B, LD].
    p_loc2 = p_loc.reshape(n_z * B, TD)
    p_scale2 = p_scale.reshape(n_z * B, TD)
    y2 = y_target.reshape(B, TD)
    qc_loc2 = qc_loc.reshape(B, LD)
    qc_scale2 = qc_scale.reshape(B, LD)
    qt_loc2 = qt_loc.reshape(B, LD)
    qt_scale2 = qt_scale.reshape(B, LD)

    # Pad the flattened target axis to a multiple of 128 with NEUTRAL values
    # (mu = y = 0, sigma = 1 contribute exactly 0 to the log-density sum;
    # logp_const below uses the unpadded element count).
    TDp = ((TD + 127) // 128) * 128
    pad = TDp - TD
    if pad:
        p_loc2 = jnp.pad(p_loc2, ((0, 0), (0, pad)))
        p_scale2 = jnp.pad(p_scale2, ((0, 0), (0, pad)), constant_values=1.0)
        y2 = jnp.pad(y2, ((0, 0), (0, pad)))

    g_z = _pick_group(n_z, B, itemsize)
    rows = g_z * B
    n_zg = n_z // g_z

    tC = _pick_col_tile(TDp, rows, B, itemsize, vmem_budget_bytes)
    nC = TDp // tC

    kernel = partial(
        _elbo_kernel,
        beta=float(beta), n_z=n_z, batch=B, n_lat=L, g_z=g_z,
        logp_const=float(n_z * B * T * Dy) * _HALF_LOG_2PI,
    )

    p_spec = pl.BlockSpec((rows, tC), lambda c, g: (g, c))
    y_spec = pl.BlockSpec((B, tC), lambda c, g: (0, c))   # no re-DMA across g
    q_spec = pl.BlockSpec((B, LD), lambda c, g: (0, 0))   # fetched once

    grid_spec = pltpu.PrefetchScalarGridSpec(
        num_scalar_prefetch=0,
        grid=(nC, n_zg),
        in_specs=[p_spec, p_spec, y_spec, q_spec, q_spec, q_spec, q_spec],
        out_specs=pl.BlockSpec(memory_space=pltpu.MemorySpace.SMEM),
        scratch_shapes=[pltpu.VMEM((rows, tC), jnp.float32)],
    )

    out = pl.pallas_call(
        kernel,
        out_shape=jax.ShapeDtypeStruct((3,), jnp.float32),
        grid_spec=grid_spec,
        compiler_params=pltpu.CompilerParams(
            dimension_semantics=("arbitrary", "arbitrary"),
            vmem_limit_bytes=40 << 20),
    )(p_loc2, p_scale2, y2, qc_loc2, qc_scale2, qt_loc2, qt_scale2)

    return out[0], out[1], out[2]


def elbo_loss_ref(p_loc, p_scale, y_target, qc_loc, qc_scale, qt_loc, qt_scale,
                  beta=1.0):
    """Pure-JAX reference mirroring the PyTorch module (training, 'mean')."""
    f32 = jnp.float32
    p_loc = p_loc.astype(f32)
    p_scale = p_scale.astype(f32)
    y = y_target.astype(f32)
    qc_loc, qc_scale = qc_loc.astype(f32), qc_scale.astype(f32)
    qt_loc, qt_scale = qt_loc.astype(f32), qt_scale.astype(f32)

    diff = (y - p_loc) / p_scale                  # y broadcasts over n_z
    logp = -0.5 * diff * diff - jnp.log(p_scale) - _HALF_LOG_2PI
    log_prob = jnp.sum(logp, axis=-1)             # event dim Dy -> [n_z, B, T]
    sum_log_p = jnp.sum(log_prob, axis=2)         # sum over targets -> [n_z, B]
    e_z = jnp.mean(sum_log_p, axis=0)             # [B]
    var_ratio = (qt_scale / qc_scale) ** 2
    t1 = ((qt_loc - qc_loc) / qc_scale) ** 2
    kl_e = 0.5 * (var_ratio + t1 - 1.0 - jnp.log(var_ratio))
    kl_z = jnp.sum(kl_e, axis=-1)                 # event dim Dz -> [B, L]
    e_kl = jnp.sum(kl_z, axis=1)                  # [B]
    loss = -(e_z - beta * e_kl)
    nll = -e_z
    return jnp.mean(loss), jnp.mean(kl_z), jnp.mean(nll)


def _make_inputs(key, n_z, B, T, Dy, L, Dz, dtype):
    ks = jax.random.split(key, 7)
    def nrm(k, shape):
        return jax.random.normal(k, shape, jnp.float32)
    p_loc = nrm(ks[0], (n_z, B, T, Dy)).astype(dtype)
    p_scale = (jax.nn.softplus(nrm(ks[1], (n_z, B, T, Dy))) + 0.1).astype(dtype)
    y_target = nrm(ks[2], (B, T, Dy)).astype(dtype)
    qc_loc = nrm(ks[3], (B, L, Dz)).astype(dtype)
    qc_scale = (jax.nn.softplus(nrm(ks[4], (B, L, Dz))) + 0.1).astype(dtype)
    qt_loc = nrm(ks[5], (B, L, Dz)).astype(dtype)
    qt_scale = (jax.nn.softplus(nrm(ks[6], (B, L, Dz))) + 0.1).astype(dtype)
    return p_loc, p_scale, y_target, qc_loc, qc_scale, qt_loc, qt_scale


if __name__ == "__main__":
    key = jax.random.PRNGKey(0)
    k1, k2 = jax.random.split(key)

    # Case 1: f32, T*Dy = 320 (not a 128 multiple -> exercises neutral padding),
    # tiny VMEM budget -> several column tiles, so the pipelined accumulate /
    # finalize path is exercised.
    args1 = _make_inputs(k1, n_z=4, B=2, T=16, Dy=20, L=8, Dz=16,
                         dtype=jnp.float32)
    out1 = elbo_loss(*args1, beta=1.0, vmem_budget_bytes=32 * 1024)
    out1 = jax.block_until_ready(out1)
    ref1 = elbo_loss_ref(*args1, beta=1.0)
    for got, want in zip(out1, ref1):
        assert jnp.allclose(got, want, rtol=1e-4, atol=1e-4), (got, want)

    # Case 2: bf16 inputs kept native through the DMA (cast to f32 in-kernel),
    # B=8 / n_z=6 -> z-group axis of size 3 exercises the inner grid axis.
    args2 = _make_inputs(k2, n_z=6, B=8, T=10, Dy=16, L=8, Dz=16,
                         dtype=jnp.bfloat16)
    out2 = elbo_loss(*args2, beta=0.5)
    out2 = jax.block_until_ready(out2)
    ref2 = elbo_loss_ref(*args2, beta=0.5)
    for got, want in zip(out2, ref2):
        assert jnp.allclose(got, want, rtol=2e-2, atol=2e-2), (got, want)

    print("KERNEL_OK")
</pallas_src>

<mosaic_0001>
module attributes {stable_mosaic.version = 11 : i64} {
  func.func @_elbo_kernel(%arg0: i32, %arg1: i32, %arg2: memref<8x128xf32, #tpu.memory_space<vmem>>, %arg3: memref<8x128xf32, #tpu.memory_space<vmem>>, %arg4: memref<2x128xf32, #tpu.memory_space<vmem>>, %arg5: memref<2x128xf32, #tpu.memory_space<vmem>>, %arg6: memref<2x128xf32, #tpu.memory_space<vmem>>, %arg7: memref<2x128xf32, #tpu.memory_space<vmem>>, %arg8: memref<2x128xf32, #tpu.memory_space<vmem>>, %arg9: memref<3xf32, #tpu.memory_space<smem>>, %arg10: memref<8x128xf32, #tpu.memory_space<vmem>>) attributes {dimension_semantics = [#tpu.dimension_semantics<arbitrary>, #tpu.dimension_semantics<arbitrary>], iteration_bounds = array<i64: 3, 1>, scalar_prefetch = 0 : i64, scratch_operands = 1 : i64, tpu.core_type = #tpu.core_type<tc>, window_params = [{transform_indices = @transform_0, window_bounds = array<i64: 8, 128>}, {transform_indices = @transform_1, window_bounds = array<i64: 8, 128>}, {transform_indices = @transform_2, window_bounds = array<i64: 2, 128>}, {pipeline_mode = #tpu.pipeline_mode<synchronous>, transform_indices = @transform_3, window_bounds = array<i64: 2, 128>}, {pipeline_mode = #tpu.pipeline_mode<synchronous>, transform_indices = @transform_4, window_bounds = array<i64: 2, 128>}, {pipeline_mode = #tpu.pipeline_mode<synchronous>, transform_indices = @transform_5, window_bounds = array<i64: 2, 128>}, {pipeline_mode = #tpu.pipeline_mode<synchronous>, transform_indices = @transform_6, window_bounds = array<i64: 2, 128>}, {transform_indices = @transform_7, window_bounds = array<i64: 3>}]} {
    %c0_i32 = arith.constant 0 : i32
    %0 = arith.cmpi eq, %arg0, %c0_i32 : i32
    %c0_i32_0 = arith.constant 0 : i32
    %1 = arith.cmpi eq, %arg1, %c0_i32_0 : i32
    %2 = arith.andi %0, %1 : i1
    %3 = arith.extui %2 : i1 to i32
    %c0_i32_1 = arith.constant 0 : i32
    %4 = arith.cmpi ne, %3, %c0_i32_1 : i32
    scf.if %4 {
      %cst_14 = arith.constant 0.000000e+00 : f32
      %29 = vector.broadcast %cst_14 : f32 to vector<8x128xf32>
      %c0_15 = arith.constant 0 : index
      %c0_16 = arith.constant 0 : index
      %30 = vector.load %arg10[%c0_15, %c0_16] : memref<8x128xf32, #tpu.memory_space<vmem>>, vector<8x128xf32>
      tpu.vector_store %arg10[%c0_15, %c0_16], %29 {strides = array<i32>} : memref<8x128xf32, #tpu.memory_space<vmem>>, vector<8x128xf32>,
    } else {
    }
    %c0 = arith.constant 0 : index
    %c0_2 = arith.constant 0 : index
    %5 = vector.load %arg2[%c0, %c0_2] : memref<8x128xf32, #tpu.memory_space<vmem>>, vector<8x128xf32>
    %c0_3 = arith.constant 0 : index
    %c0_4 = arith.constant 0 : index
    %6 = vector.load %arg3[%c0_3, %c0_4] : memref<8x128xf32, #tpu.memory_space<vmem>>, vector<8x128xf32>
    %c0_5 = arith.constant 0 : index
    %c0_6 = arith.constant 0 : index
    %7 = vector.load %arg4[%c0_5, %c0_6] : memref<2x128xf32, #tpu.memory_space<vmem>>, vector<2x128xf32>
    %8 = tpu.concatenate %7, %7, %7, %7 in 0 : vector<2x128xf32>, vector<2x128xf32>, vector<2x128xf32>, vector<2x128xf32> -> vector<8x128xf32>
    %9 = tpu.reciprocal %6 {approx = true} : vector<8x128xf32> -> vector<8x128xf32>
    %10 = arith.mulf %6, %9 : vector<8x128xf32>
    %cst = arith.constant 2.000000e+00 : f32
    %11 = vector.broadcast %cst : f32 to vector<8x128xf32>
    %12 = arith.subf %11, %10 : vector<8x128xf32>
    %13 = arith.mulf %9, %12 : vector<8x128xf32>
    %14 = arith.subf %8, %5 : vector<8x128xf32>
    %15 = arith.mulf %14, %13 : vector<8x128xf32>
    %c0_7 = arith.constant 0 : index
    %c0_8 = arith.constant 0 : index
    %16 = vector.load %arg10[%c0_7, %c0_8] : memref<8x128xf32, #tpu.memory_space<vmem>>, vector<8x128xf32>
    %17 = arith.mulf %15, %15 : vector<8x128xf32>
    %cst_9 = arith.constant -5.000000e-01 : f32
    %18 = vector.broadcast %cst_9 : f32 to vector<8x128xf32>
    %19 = arith.mulf %18, %17 : vector<8x128xf32>
    %20 = math.log %6 : vector<8x128xf32>
    %21 = arith.subf %19, %20 : vector<8x128xf32>
    %22 = arith.addf %16, %21 : vector<8x128xf32>
    %c0_10 = arith.constant 0 : index
    %c0_11 = arith.constant 0 : index
    %23 = vector.load %arg10[%c0_10, %c0_11] : memref<8x128xf32, #tpu.memory_space<vmem>>, vector<8x128xf32>
    tpu.vector_store %arg10[%c0_10, %c0_11], %22 {strides = array<i32>} : memref<8x128xf32, #tpu.memory_space<vmem>>, vector<8x128xf32>,
    %c2_i32 = arith.constant 2 : i32
    %24 = arith.cmpi eq, %arg0, %c2_i32 : i32
    %c0_i32_12 = arith.constant 0 : i32
    %25 = arith.cmpi eq, %arg1, %c0_i32_12 : i32
    %26 = arith.andi %24, %25 : i1
    %27 = arith.extui %26 : i1 to i32
    %c0_i32_13 = arith.constant 0 : i32
    %28 = arith.cmpi ne, %27, %c0_i32_13 : i32
    scf.if %28 {
      %c0_14 = arith.constant 0 : index
      %c0_15 = arith.constant 0 : index
      %29 = vector.load %arg7[%c0_14, %c0_15] : memref<2x128xf32, #tpu.memory_space<vmem>>, vector<2x128xf32>
      %c0_16 = arith.constant 0 : index
      %c0_17 = arith.constant 0 : index
      %30 = vector.load %arg8[%c0_16, %c0_17] : memref<2x128xf32, #tpu.memory_space<vmem>>, vector<2x128xf32>
      %c0_18 = arith.constant 0 : index
      %c0_19 = arith.constant 0 : index
      %31 = vector.load %arg5[%c0_18, %c0_19] : memref<2x128xf32, #tpu.memory_space<vmem>>, vector<2x128xf32>
      %c0_20 = arith.constant 0 : index
      %c0_21 = arith.constant 0 : index
      %32 = vector.load %arg6[%c0_20, %c0_21] : memref<2x128xf32, #tpu.memory_space<vmem>>, vector<2x128xf32>
      %33 = arith.divf %30, %32 : vector<2x128xf32>
      %34 = arith.subf %29, %31 : vector<2x128xf32>
      %35 = arith.divf %34, %32 : vector<2x128xf32>
      %36 = arith.mulf %33, %33 : vector<2x128xf32>
      %37 = arith.mulf %35, %35 : vector<2x128xf32>
      %38 = arith.addf %36, %37 : vector<2x128xf32>
      %cst_22 = arith.constant 5.000000e-01 : f32
      %39 = vector.broadcast %cst_22 : f32 to vector<2x128xf32>
      %40 = arith.mulf %39, %38 : vector<2x128xf32>
      %41 = math.log %33 : vector<2x128xf32>
      %42 = arith.subf %40, %41 : vector<2x128xf32>
      %cst_23 = arith.constant 5.000000e-01 : f32
      %43 = vector.broadcast %cst_23 : f32 to vector<2x128xf32>
      %44 = arith.subf %42, %43 : vector<2x128xf32>
      %45 = vector.shape_cast %44 : vector<2x128xf32> to vector<1x2x128xf32>
      %cst_24 = arith.constant dense<0.000000e+00> : vector<1xf32>
      %46 = vector.multi_reduction <add>, %45, %cst_24 [1, 2] : vector<1x2x128xf32> to vector<1xf32>
      %47 = vector.shape_cast %46 : vector<1xf32> to vector<1x1x1xf32>
      %48 = vector.extract %47[0, 0, 0] : f32 from vector<1x1x1xf32>
      %c0_25 = arith.constant 0 : index
      %c0_26 = arith.constant 0 : index
      %49 = vector.load %arg10[%c0_25, %c0_26] : memref<8x128xf32, #tpu.memory_space<vmem>>, vector<8x128xf32>
      %50 = vector.shape_cast %49 : vector<8x128xf32> to vector<1x8x128xf32>
      %cst_27 = arith.constant dense<0.000000e+00> : vector<1xf32>
      %51 = vector.multi_reduction <add>, %50, %cst_27 [1, 2] : vector<1x8x128xf32> to vector<1xf32>
      %52 = vector.shape_cast %51 : vector<1xf32> to vector<1x1x1xf32>
      %53 = vector.extract %52[0, 0, 0] : f32 from vector<1x1x1xf32>
      %cst_28 = arith.constant 2352.48267 : f32
      %54 = arith.subf %53, %cst_28 : f32
      %cst_29 = arith.constant 1.000000e+00 : f32
      %55 = arith.mulf %cst_29, %48 : f32
      %cst_30 = arith.constant 4.000000e+00 : f32
      %56 = arith.divf %54, %cst_30 : f32
      %57 = arith.subf %55, %56 : f32
      %cst_31 = arith.constant 2.000000e+00 : f32
      %58 = arith.divf %57, %cst_31 : f32
      %c0_32 = arith.constant 0 : index
      %59 = memref.load %arg9[%c0_32] : memref<3xf32, #tpu.memory_space<smem>>
      memref.store %58, %arg9[%c0_32] : memref<3xf32, #tpu.memory_space<smem>>
      %cst_33 = arith.constant 1.600000e+01 : f32
      %60 = arith.divf %48, %cst_33 : f32
      %c1 = arith.constant 1 : index
      %61 = memref.load %arg9[%c1] : memref<3xf32, #tpu.memory_space<smem>>
      memref.store %60, %arg9[%c1] : memref<3xf32, #tpu.memory_space<smem>>
      %cst_34 = arith.constant 0.000000e+00 : f32
      %62 = arith.subf %cst_34, %54 : f32
      %cst_35 = arith.constant 8.000000e+00 : f32
      %63 = arith.divf %62, %cst_35 : f32
      %c2 = arith.constant 2 : index
      %64 = memref.load %arg9[%c2] : memref<3xf32, #tpu.memory_space<smem>>
      memref.store %63, %arg9[%c2] : memref<3xf32, #tpu.memory_space<smem>>
    } else {
    }
    return
  }
  func.func @transform_0(%arg0: i32, %arg1: i32) -> (i32, i32) {
    %c0_i32 = arith.constant 0 : i32
    return %arg1, %arg0 : i32, i32
  }
  func.func @transform_1(%arg0: i32, %arg1: i32) -> (i32, i32) {
    %c0_i32 = arith.constant 0 : i32
    return %arg1, %arg0 : i32, i32
  }
  func.func @transform_2(%arg0: i32, %arg1: i32) -> (i32, i32) {
    %c0_i32 = arith.constant 0 : i32
    %c0_i32_0 = arith.constant 0 : i32
    return %c0_i32, %arg0 : i32, i32
  }
  func.func @transform_3(%arg0: i32, %arg1: i32) -> (i32, i32) {
    %c0_i32 = arith.constant 0 : i32
    %c0_i32_0 = arith.constant 0 : i32
    %c0_i32_1 = arith.constant 0 : i32
    return %c0_i32, %c0_i32_0 : i32, i32
  }
  func.func @transform_4(%arg0: i32, %arg1: i32) -> (i32, i32) {
    %c0_i32 = arith.constant 0 : i32
    %c0_i32_0 = arith.constant 0 : i32
    %c0_i32_1 = arith.constant 0 : i32
    return %c0_i32, %c0_i32_0 : i32, i32
  }
  func.func @transform_5(%arg0: i32, %arg1: i32) -> (i32, i32) {
    %c0_i32 = arith.constant 0 : i32
    %c0_i32_0 = arith.constant 0 : i32
    %c0_i32_1 = arith.constant 0 : i32
    return %c0_i32, %c0_i32_0 : i32, i32
  }
  func.func @transform_6(%arg0: i32, %arg1: i32) -> (i32, i32) {
    %c0_i32 = arith.constant 0 : i32
    %c0_i32_0 = arith.constant 0 : i32
    %c0_i32_1 = arith.constant 0 : i32
    return %c0_i32, %c0_i32_0 : i32, i32
  }
  func.func @transform_7(%arg0: i32, %arg1: i32) -> i32 {
    %c0_i32 = arith.constant 0 : i32
    %c0_i32_0 = arith.constant 0 : i32
    return %c0_i32 : i32
  }
}

</mosaic_0001>

<llo_original>
// kernel: tpu_custom_call.1
$region0: #{tpu_custom_call.1}
  #allocation0 [shape = 'u32[]', space=smem, size = 0x4, offset = 0x4, fixed_abs, tag = 'smem constant byte address 0x4 - core index']
  #allocation1 [shape = 'u32[144,128]{1,0:T(1,128)}', space=vmem, size = 0x12000, scoped, tag = 'internal scratch']
  #allocation2 [shape = 'f32[8,128]{1,0:T(8,128)}', space=vmem, size = 0x1000, scoped, tag = 'scratch operand']
  %s0 = inlined_call_operand.hbm [shape: f32[8,384], index: 0, kind: input, shape index: {}]
  %s1 = inlined_call_operand.hbm [shape: f32[8,384], index: 1, kind: input, shape index: {}]
  %s2 = inlined_call_operand.vmem [shape: f32[2,384], index: 2, kind: input, shape index: {}]
  %s3 = inlined_call_operand.vmem [shape: f32[2,128], index: 3, kind: input, shape index: {}]
  %s4 = inlined_call_operand.vmem [shape: f32[2,128], index: 4, kind: input, shape index: {}]
  %s5 = inlined_call_operand.vmem [shape: f32[2,128], index: 5, kind: input, shape index: {}]
  %s6 = inlined_call_operand.vmem [shape: f32[2,128], index: 6, kind: input, shape index: {}]
  %s7 = inlined_call_operand.hbm [shape: f32[3], index: 7, kind: output, shape index: {}]
  %s8 = sld [smem:[#allocation0]]
  $region77: #{tpu_custom_call.1} parent=0
    _
  %s10 = ssub.s32 1, %s8
  %s11 = scalar_select 0, %s10, %s8
  $region1: #{tpu_custom_call.1} parent=0
    #allocation3 [shape = 'u8[8192]{0}', space=vmem, size = 0x2000, scoped, tag = 'input window, operand 0']
    #allocation4 [shape = 's32[2]{0}', space=sflag, size = 0x8, scoped, tag = 'scoped memory for tpu_custom_call.1']
    #allocation5 [shape = 's32[2]{0}', space=sflag, size = 0x8, scoped, tag = 'scoped memory for tpu_custom_call.1']
    #allocation6 [shape = 'u8[8192]{0}', space=vmem, size = 0x2000, scoped, tag = 'input window, operand 1']
    #allocation7 [shape = 's32[2]{0}', space=sflag, size = 0x8, scoped, tag = 'scoped memory for tpu_custom_call.1']
    #allocation8 [shape = 'u8[512]{0}', space=smem, size = 0x200, scoped, tag = 'output window, operand 0, single buffered']
    %12 = vsyncpa [#allocation4], 0
    %s13 = scalar_lea.sflag [#allocation4], 1
    %14 = vsyncpa %s13, 0
    %15 = vsyncpa [#allocation7], 0
    %s16 = scalar_lea.sflag [#allocation7], 1
    %17 = vsyncpa %s16, 0
    %18 = vsyncpa [#allocation5], 0
    loop: start=0, step=1, limit=5
    $region2: #{tpu_custom_call.1} parent=1 // loop_pre_header
      _
    $region3: #{tpu_custom_call.1} parent=1 // loop_header
      %s20 = sphi 0, %s24
      %p21 = scmp.ge.s32.totalorder %s20, 5
      %s27 = sphi 0, %s39
      %s28 = sphi 0, %s35
      %s29 = sphi 0, %s27
      %s30 = sphi 0, %s28
      %s31 = sphi 0, %s29
      %s32 = sphi 0, %s30
      %s44 = sphi 0, %s46
      %s47 = sphi 0, %s44
      %s48 = sphi 0, %s47
      %s64 = sphi 0, %s48
      %s72 = sphi 0, %s74
      %s75 = sphi 0, %s72
      %s76 = sphi 0, %s75
      %s92 = sphi 0, %s76
      %s98 = sphi 0, %s100
      %s101 = sphi 0, %s98
      %s102 = sphi 0, %s101
      %s118 = sphi 0, %s102
      %s122 = sphi 0, %s122
      %s124 = sphi 0, %s122
      %s125 = sphi 0, %s124
      %s139 = sphi 0, %s125
      %s143 = sphi 0, %s143
      %s145 = sphi 0, %s143
      %s146 = sphi 0, %s145
      %s160 = sphi 0, %s146
      %s164 = sphi 0, %s164
      %s166 = sphi 0, %s164
      %s167 = sphi 0, %s166
      %s181 = sphi 0, %s167
      %s185 = sphi 0, %s185
      %s187 = sphi 0, %s185
      %s188 = sphi 0, %s187
      %s202 = sphi 0, %s188
      %s206 = sphi 0, %s206
      %s208 = sphi 0, %s206
      %s209 = sphi 0, %s208
      %s223 = sphi 0, %s209
    $region4: #{tpu_custom_call.1} parent=1 // loop_header_branch
      %23 = sbr.rel (%p21) target = $region8
    $region5: #{tpu_custom_call.1} parent=1 // loop_body
      %s25 = ssub.s32 %s20, 1
      %s26 = ssub.s32 %s20, 2
      %s33 = sadd.s32 1, %s28
      %p34 = scmp.ge.s32.totalorder %s33, 1
      %s35 = scalar_select %p34, 0, %s33
      %s36 = sadd.s32 1, %s27
      %s37 = scalar_select %p34, %s36, %s27
      %p38 = scmp.ge.s32.totalorder %s37, 3
      %s39 = scalar_select %p38, 0, %s37
      %s40 = ssub.s32 %s28, %s35
      %s41 = ssub.s32 %s27, %s39
      %s42 = sor.u32 %s40, %s41
      %p43 = scmp.eq.s32.totalorder %s42, 0
      %s45 = sadd.s32 %s44, 1
      %s46 = scalar_select %p43, %s44, %s45
      %p49 = pneg %p43
      %p50 = scmp.eq.s32.totalorder %s20, 2
      %p51 = por %p49, %p50
      %p52 = scmp.ne.s32.totalorder %s44, %s47
      %p53 = scmp.eq.s32.totalorder %s20, 0
      %p54 = por %p52, %p53
      %p55 = scmp.ne.s32.totalorder %s44, %s47
      %p56 = scmp.eq.s32.totalorder %s25, 2
      %p57 = por %p55, %p56
      %p58 = scmp.ne.s32.totalorder %s47, %s48
      %p59 = scmp.eq.s32.totalorder %s25, 0
      %p60 = por %p58, %p59
      %p61 = scmp.ne.s32.totalorder %s47, %s48
      %p62 = scmp.eq.s32.totalorder %s26, 2
      %p63 = por %p61, %p62
      %p65 = scmp.ne.s32.totalorder %s48, %s64
      %p66 = scmp.eq.s32.totalorder %s26, 0
      %p67 = por %p65, %p66
      %s68 = ssub.s32 %s28, %s35
      %s69 = ssub.s32 %s27, %s39
      %s70 = sor.u32 %s68, %s69
      %p71 = scmp.eq.s32.totalorder %s70, 0
      %s73 = sadd.s32 %s72, 1
      %s74 = scalar_select %p71, %s72, %s73
      %p77 = pneg %p71
      %p78 = scmp.eq.s32.totalorder %s20, 2
      %p79 = por %p77, %p78
      %p80 = scmp.ne.s32.totalorder %s72, %s75
      %p81 = scmp.eq.s32.totalorder %s20, 0
      %p82 = por %p80, %p81
      %p83 = scmp.ne.s32.totalorder %s72, %s75
      %p84 = scmp.eq.s32.totalorder %s25, 2
      %p85 = por %p83, %p84
      %p86 = scmp.ne.s32.totalorder %s75, %s76
      %p87 = scmp.eq.s32.totalorder %s25, 0
      %p88 = por %p86, %p87
      %p89 = scmp.ne.s32.totalorder %s75, %s76
      %p90 = scmp.eq.s32.totalorder %s26, 2
      %p91 = por %p89, %p90
      %p93 = scmp.ne.s32.totalorder %s76, %s92
      %p94 = scmp.eq.s32.totalorder %s26, 0
      %p95 = por %p93, %p94
      %s96 = ssub.s32 %s27, %s39
      %p97 = scmp.eq.s32.totalorder %s96, 0
      %s99 = sadd.s32 %s98, 1
      %s100 = scalar_select %p97, %s98, %s99
      %p103 = pneg %p97
      %p104 = scmp.eq.s32.totalorder %s20, 2
      %p105 = por %p103, %p104
      %p106 = scmp.ne.s32.totalorder %s98, %s101
      %p107 = scmp.eq.s32.totalorder %s20, 0
      %p108 = por %p106, %p107
      %p109 = scmp.ne.s32.totalorder %s98, %s101
      %p110 = scmp.eq.s32.totalorder %s25, 2
      %p111 = por %p109, %p110
      %p112 = scmp.ne.s32.totalorder %s101, %s102
      %p113 = scmp.eq.s32.totalorder %s25, 0
      %p114 = por %p112, %p113
      %p115 = scmp.ne.s32.totalorder %s101, %s102
      %p116 = scmp.eq.s32.totalorder %s26, 2
      %p117 = por %p115, %p116
      %p119 = scmp.ne.s32.totalorder %s102, %s118
      %p120 = scmp.eq.s32.totalorder %s26, 0
      %p121 = por %p119, %p120
      %s123 = sadd.s32 %s122, 1
      %p126 = scmp.eq.s32.totalorder %s20, 2
      %p127 = scmp.ne.s32.totalorder %s122, %s124
      %p128 = scmp.eq.s32.totalorder %s20, 0
      %p129 = por %p127, %p128
      %p130 = scmp.ne.s32.totalorder %s122, %s124
      %p131 = scmp.eq.s32.totalorder %s25, 2
      %p132 = por %p130, %p131
      %p133 = scmp.ne.s32.totalorder %s124, %s125
      %p134 = scmp.eq.s32.totalorder %s25, 0
      %p135 = por %p133, %p134
      %p136 = scmp.ne.s32.totalorder %s124, %s125
      %p137 = scmp.eq.s32.totalorder %s26, 2
      %p138 = por %p136, %p137
      %p140 = scmp.ne.s32.totalorder %s125, %s139
      %p141 = scmp.eq.s32.totalorder %s26, 0
      %p142 = por %p140, %p141
      %s144 = sadd.s32 %s143, 1
      %p147 = scmp.eq.s32.totalorder %s20, 2
      %p148 = scmp.ne.s32.totalorder %s143, %s145
      %p149 = scmp.eq.s32.totalorder %s20, 0
      %p150 = por %p148, %p149
      %p151 = scmp.ne.s32.totalorder %s143, %s145
      %p152 = scmp.eq.s32.totalorder %s25, 2
      %p153 = por %p151, %p152
      %p154 = scmp.ne.s32.totalorder %s145, %s146
      %p155 = scmp.eq.s32.totalorder %s25, 0
      %p156 = por %p154, %p155
      %p157 = scmp.ne.s32.totalorder %s145, %s146
      %p158 = scmp.eq.s32.totalorder %s26, 2
      %p159 = por %p157, %p158
      %p161 = scmp.ne.s32.totalorder %s146, %s160
      %p162 = scmp.eq.s32.totalorder %s26, 0
      %p163 = por %p161, %p162
      %s165 = sadd.s32 %s164, 1
      %p168 = scmp.eq.s32.totalorder %s20, 2
      %p169 = scmp.ne.s32.totalorder %s164, %s166
      %p170 = scmp.eq.s32.totalorder %s20, 0
      %p171 = por %p169, %p170
      %p172 = scmp.ne.s32.totalorder %s164, %s166
      %p173 = scmp.eq.s32.totalorder %s25, 2
      %p174 = por %p172, %p173
      %p175 = scmp.ne.s32.totalorder %s166, %s167
      %p176 = scmp.eq.s32.totalorder %s25, 0
      %p177 = por %p175, %p176
      %p178 = scmp.ne.s32.totalorder %s166, %s167
      %p179 = scmp.eq.s32.totalorder %s26, 2
      %p180 = por %p178, %p179
      %p182 = scmp.ne.s32.totalorder %s167, %s181
      %p183 = scmp.eq.s32.totalorder %s26, 0
      %p184 = por %p182, %p183
      %s186 = sadd.s32 %s185, 1
      %p189 = scmp.eq.s32.totalorder %s20, 2
      %p190 = scmp.ne.s32.totalorder %s185, %s187
      %p191 = scmp.eq.s32.totalorder %s20, 0
      %p192 = por %p190, %p191
      %p193 = scmp.ne.s32.totalorder %s185, %s187
      %p194 = scmp.eq.s32.totalorder %s25, 2
      %p195 = por %p193, %p194
      %p196 = scmp.ne.s32.totalorder %s187, %s188
      %p197 = scmp.eq.s32.totalorder %s25, 0
      %p198 = por %p196, %p197
      %p199 = scmp.ne.s32.totalorder %s187, %s188
      %p200 = scmp.eq.s32.totalorder %s26, 2
      %p201 = por %p199, %p200
      %p203 = scmp.ne.s32.totalorder %s188, %s202
      %p204 = scmp.eq.s32.totalorder %s26, 0
      %p205 = por %p203, %p204
      %s207 = sadd.s32 %s206, 1
      %p210 = scmp.eq.s32.totalorder %s20, 2
      %p211 = scmp.ne.s32.totalorder %s206, %s208
      %p212 = scmp.eq.s32.totalorder %s20, 0
      %p213 = por %p211, %p212
      %p214 = scmp.ne.s32.totalorder %s206, %s208
      %p215 = scmp.eq.s32.totalorder %s25, 2
      %p216 = por %p214, %p215
      %p217 = scmp.ne.s32.totalorder %s208, %s209
      %p218 = scmp.eq.s32.totalorder %s25, 0
      %p219 = por %p217, %p218
      %p220 = scmp.ne.s32.totalorder %s208, %s209
      %p221 = scmp.eq.s32.totalorder %s26, 2
      %p222 = por %p220, %p221
      %p224 = scmp.ne.s32.totalorder %s209, %s223
      %p225 = scmp.eq.s32.totalorder %s26, 0
      %p226 = por %p224, %p225
      %p227 = scmp.le.s32.totalorder 1, %s20
      %p228 = scmp.lt.s32.totalorder %s20, 4
      %p229 = pnand %p227, %p228
      %p230 = pneg %p229
      // Predicated region
      $region9: #{tpu_custom_call.1} parent=5 // pred_check
        _
      $region10: #{tpu_custom_call.1} parent=5 // pred_check_branch
        %232 = sbr.rel (%p229) target = $region12
      $region11: #{tpu_custom_call.1} parent=5 // pred_region
        %s233 = ssub.s32 %s20, 1
        // Predicated region
        $region13: #{tpu_custom_call.1} parent=11 // pred_check
          %p234 = pneg %p135
        $region14: #{tpu_custom_call.1} parent=11 // pred_check_branch
          %236 = sbr.rel (%p234) target = $region16
        $region15: #{tpu_custom_call.1} parent=11 // pred_region
          _
        $region16: #{tpu_custom_call.1} parent=11 // pred_fallthru
          _
        // Predicated region
        $region17: #{tpu_custom_call.1} parent=11 // pred_check
          %p237 = pneg %p156
        $region18: #{tpu_custom_call.1} parent=11 // pred_check_branch
          %239 = sbr.rel (%p237) target = $region20
        $region19: #{tpu_custom_call.1} parent=11 // pred_region
          _
        $region20: #{tpu_custom_call.1} parent=11 // pred_fallthru
          _
        // Predicated region
        $region21: #{tpu_custom_call.1} parent=11 // pred_check
          %p240 = pneg %p177
        $region22: #{tpu_custom_call.1} parent=11 // pred_check_branch
          %242 = sbr.rel (%p240) target = $region24
        $region23: #{tpu_custom_call.1} parent=11 // pred_region
          _
        $region24: #{tpu_custom_call.1} parent=11 // pred_fallthru
          _
        // Predicated region
        $region25: #{tpu_custom_call.1} parent=11 // pred_check
          %p243 = pneg %p198
        $region26: #{tpu_custom_call.1} parent=11 // pred_check_branch
          %245 = sbr.rel (%p243) target = $region28
        $region27: #{tpu_custom_call.1} parent=11 // pred_region
          _
        $region28: #{tpu_custom_call.1} parent=11 // pred_fallthru
          _
      $region12: #{tpu_custom_call.1} parent=5 // pred_fallthru
        _
      %p246 = scmp.lt.s32.totalorder %s20, 3
      // Predicated region
      $region29: #{tpu_custom_call.1} parent=5 // pred_check
        %p247 = pneg %p246
      $region30: #{tpu_custom_call.1} parent=5 // pred_check_branch
        %249 = sbr.rel (%p247) target = $region32
      $region31: #{tpu_custom_call.1} parent=5 // pred_region
        // Predicated region
        $region33: #{tpu_custom_call.1} parent=31 // pred_check
          %p250 = pneg %p54
        $region34: #{tpu_custom_call.1} parent=31 // pred_check_branch
          %252 = sbr.rel (%p250) target = $region36
        $region35: #{tpu_custom_call.1} parent=31 // pred_region
          %s253 = sand.u32 %s44, 1
          %s254 = scalar_lea.sflag [#allocation4], %s253
          %s255 = sand.u32 %s44, 1
          %s256 = smul.addr %s255, 8
          %s257 = scalar_lea.vmem [#allocation3], %s256
          %s259 = ssub.s32 128, 128
          %260 = vsyncadd %s254, %s259
          %s261 = smul.addr %s28, 3
          %s262 = sadd.s32 %s27, %s261
          %s263 = smul.addr %s262, 128
          %s264 = scalar_lea.hbm %s0, %s263
          %s266 = sshll.u32 %s257, 4
          %s267 = int_to_ptr.vmem [resolvable:$true] %s266
          %269 = dma.hbm_to_vmem [thread:$0]  %s264, 128, %s267, %s254
        $region36: #{tpu_custom_call.1} parent=31 // pred_fallthru
          _
        // Predicated region
        $region37: #{tpu_custom_call.1} parent=31 // pred_check
          %p270 = pneg %p82
        $region38: #{tpu_custom_call.1} parent=31 // pred_check_branch
          %272 = sbr.rel (%p270) target = $region40
        $region39: #{tpu_custom_call.1} parent=31 // pred_region
          %s273 = sand.u32 %s72, 1
          %s274 = scalar_lea.sflag [#allocation7], %s273
          %s275 = sand.u32 %s72, 1
          %s276 = smul.addr %s275, 8
          %s277 = scalar_lea.vmem [#allocation6], %s276
          %s279 = ssub.s32 128, 128
          %280 = vsyncadd %s274, %s279
          %s281 = smul.addr %s28, 3
          %s282 = sadd.s32 %s27, %s281
          %s283 = smul.addr %s282, 128
          %s284 = scalar_lea.hbm %s1, %s283
          %s286 = sshll.u32 %s277, 4
          %s287 = int_to_ptr.vmem [resolvable:$true] %s286
          %289 = dma.hbm_to_vmem [thread:$0]  %s284, 128, %s287, %s274
        $region40: #{tpu_custom_call.1} parent=31 // pred_fallthru
          _
        // Predicated region
        $region41: #{tpu_custom_call.1} parent=31 // pred_check
          %p290 = pneg %p108
        $region42: #{tpu_custom_call.1} parent=31 // pred_check_branch
          %292 = sbr.rel (%p290) target = $region44
        $region43: #{tpu_custom_call.1} parent=31 // pred_region
          %p293 = scmp.lt.s32.totalorder %s27, 2
          %s294 = scalar_select %p293, %s27, 2
          %s295 = smul.addr %s294, 2
          %s296 = scalar_lea.vmem %s2, %s295
        $region44: #{tpu_custom_call.1} parent=31 // pred_fallthru
          _
      $region32: #{tpu_custom_call.1} parent=5 // pred_fallthru
        _
      %p297 = scmp.le.s32.totalorder 1, %s20
      %p298 = scmp.lt.s32.totalorder %s20, 4
      %p299 = pnand %p297, %p298
      %p300 = pneg %p299
      // Predicated region
      $region45: #{tpu_custom_call.1} parent=5 // pred_check
        _
      $region46: #{tpu_custom_call.1} parent=5 // pred_check_branch
        %302 = sbr.rel (%p299) target = $region48
      $region47: #{tpu_custom_call.1} parent=5 // pred_region
        %s303 = ssub.s32 %s20, 1
        %s304 = sand.u32 %s47, 1
        %s305 = scalar_lea.sflag [#allocation4], %s304
        %s306 = sand.u32 %s47, 1
        %s307 = smul.addr %s306, 8
        %s308 = scalar_lea.vmem [#allocation3], %s307
        // Predicated region
        $region49: #{tpu_custom_call.1} parent=47 // pred_check
          %p309 = pneg %p60
        $region50: #{tpu_custom_call.1} parent=47 // pred_check_branch
          %311 = sbr.rel (%p309) target = $region52
        $region51: #{tpu_custom_call.1} parent=47 // pred_region
          %312 = dma.done %s305, 128
        $region52: #{tpu_custom_call.1} parent=47 // pred_fallthru
          _
        %s313 = sand.u32 %s75, 1
        %s314 = scalar_lea.sflag [#allocation7], %s313
        %s315 = sand.u32 %s75, 1
        %s316 = smul.addr %s315, 8
        %s317 = scalar_lea.vmem [#allocation6], %s316
        // Predicated region
        $region53: #{tpu_custom_call.1} parent=47 // pred_check
          %p318 = pneg %p88
        $region54: #{tpu_custom_call.1} parent=47 // pred_check_branch
          %320 = sbr.rel (%p318) target = $region56
        $region55: #{tpu_custom_call.1} parent=47 // pred_region
          %321 = dma.done %s314, 128
        $region56: #{tpu_custom_call.1} parent=47 // pred_fallthru
          _
        %s322 = sand.u32 %s47, 1
        %s323 = scalar_lea.sflag [#allocation4], %s322
        %s324 = sand.u32 %s47, 1
        %s325 = smul.addr %s324, 8
        %s326 = scalar_lea.vmem [#allocation3], %s325
        %p327 = pneg %p60
        %p328 = pneg %p57
        %s329 = sand.u32 %s75, 1
        %s330 = scalar_lea.sflag [#allocation7], %s329
        %s331 = sand.u32 %s75, 1
        %s332 = smul.addr %s331, 8
        %s333 = scalar_lea.vmem [#allocation6], %s332
        %p334 = pneg %p88
        %p335 = pneg %p85
        %p336 = scmp.lt.s32.totalorder %s29, 2
        %s337 = scalar_select %p336, %s29, 2
        %s338 = smul.addr %s337, 2
        %s339 = scalar_lea.vmem %s2, %s338
        %p340 = pneg %p114
        %p341 = pneg %p111
        %p342 = pneg %p135
        %p343 = pneg %p132
        %p344 = pneg %p156
        %p345 = pneg %p153
        %p346 = pneg %p177
        %p347 = pneg %p174
        %p348 = pneg %p198
        %p349 = pneg %p195
        %p350 = pneg %p219
        %p351 = pneg %p216
        %p352 = scmp.lt.s32.totalorder %s29, 2
        %s353 = scalar_select %p352, %s29, 2
        %s354 = smul.addr %s353, 2
        %s355 = scalar_lea.vmem %s2, %s354
        %p356 = scmp.eq.s32.totalorder %s29, 0
        %p357 = scmp.eq.s32.totalorder %s30, 0
        %p358 = pnand %p356, %p357
        %p359 = pneg %p358
        // Predicated region
        $region57: #{tpu_custom_call.1} parent=47 // pred_check
          _
        $region58: #{tpu_custom_call.1} parent=47 // pred_check_branch
          %361 = sbr.rel (%p358) target = $region60
        $region59: #{tpu_custom_call.1} parent=47 // pred_region
          %362 = vst [vmem:[#allocation2] sm:$0xff] 0.0
        $region60: #{tpu_custom_call.1} parent=47 // pred_fallthru
          _
        %v363 = vld [vmem:[%s308] sm:$0xff]
        %v364 = vld [vmem:[%s317] sm:$0xff]
        %v365 = vld [vmem:[%s355] sm:$0x3]
        %v367 = vrot.slane %v365, 6
        %v369 = vrot.slane %v365, 4
        %v371 = vrot.slane %v365, 2
        %vm373 = vcmask 1041408
        %v374 = vsel %vm373, %v365, %v367
        %vm375 = vcmask 1043456
        %v376 = vsel %vm375, %v374, %v369
        %vm377 = vcmask 1045504
        %v378 = vsel %vm377, %v376, %v371
        %v379 = vrcp.pop %v364
        %v380 = vmul.f32 %v364, %v379
        %v381 = vsub.f32 2.0, %v380
        %v382 = vmul.f32 %v379, %v381
        %v383 = vsub.f32 %v378, %v363
        %v384 = vmul.f32 %v383, %v382
        %v385 = vld [vmem:[#allocation2] sm:$0xff]
        %v386 = vmul.f32 %v384, %v384
        %v387 = vmul.f32 %v386, -0.5
        %v388 = vlog2.pop %v364
        %v389 = vmul.f32 %v388, 0.6931472
        %v390 = vsub.f32 %v387, %v389
        %v391 = vadd.f32 %v385, %v390
        %392 = vst [vmem:[#allocation2] sm:$0xff] %v391
        %p393 = scmp.eq.s32.totalorder %s29, 2
        %p394 = pnand %p393, %p357
        %p395 = pneg %p394
        // Predicated region
        $region61: #{tpu_custom_call.1} parent=47 // pred_check
          _
        $region62: #{tpu_custom_call.1} parent=47 // pred_check_branch
          %397 = sbr.rel (%p394) target = $region64
        $region63: #{tpu_custom_call.1} parent=47 // pred_region
          %v398 = vld [vmem:[%s5] sm:$0x3]
          %v399 = vld [vmem:[%s6] sm:$0x3]
          %v400 = vld [vmem:[%s3] sm:$0x3]
          %v401 = vld [vmem:[%s4] sm:$0x3]
          %v402 = vrcp.pop %v401
          %v403 = vmul.f32 %v399, %v402
          %v404 = vsub.f32 %v398, %v400
          %v405 = vmul.f32 %v404, %v402
          %v406 = vmul.f32 %v403, %v403
          %v407 = vmul.f32 %v405, %v405
          %v408 = vadd.f32 %v406, %v407
          %v409 = vmul.f32 %v408, 0.5
          %v410 = vlog2.pop %v403
          %v411 = vmul.f32 %v410, 0.6931472
          %v412 = vsub.f32 %v409, %v411
          %v413 = vsub.f32 %v412, 0.5
          %v414 = vsel %vm373, %v413, 0.0
          %415 = vadd.xlane.f32.xlu0 %v414
          %v416 = vpop.xlane.xlu0 %415
          %v417 = vrot.slane %v416, 4
          %v418 = vadd.f32 %v416, %v417
          %v419 = vrot.slane %v418, 2
          %v420 = vadd.f32 %v418, %v419
          %v421 = vrot.slane %v420, 1
          %v422 = vadd.f32 %v420, %v421
          %s423 = vtos %v422
          %v424 = vld [vmem:[#allocation2] sm:$0xff]
          %425 = vadd.xlane.f32.xlu0 %v424
          %v426 = vpop.xlane.xlu0 %425
          %v427 = vrot.slane %v426, 4
          %v428 = vadd.f32 %v426, %v427
          %v429 = vrot.slane %v428, 2
          %v430 = vadd.f32 %v428, %v429
          %v431 = vrot.slane %v430, 1
          %v432 = vadd.f32 %v430, %v431
          %s433 = vtos %v432
          %s434 = ssub.f32 %s433, 2352.4827
          %v435 = vrcp.pop 4.0
          %s436 = vtos %v435
          %s437 = smul.f32 %s434, %s436
          %s438 = ssub.f32 %s423, %s437
          %v439 = vrcp.pop 2.0
          %s440 = vtos %v439
          %s441 = smul.f32 %s438, %s440
          %s442 = scalar_lea.smem [#allocation8], 0
          %443 = sst [smem:[%s442]] %s441
          %v444 = vrcp.pop 16.0
          %s445 = vtos %v444
          %s446 = smul.f32 %s423, %s445
          %s447 = scalar_lea.smem [#allocation8], 1
          %448 = sst [smem:[%s447]] %s446
          %s449 = ssub.f32 0.0, %s434
          %v450 = vrcp.pop 8.0
          %s451 = vtos %v450
          %s452 = smul.f32 %s449, %s451
          %s453 = scalar_lea.smem [#allocation8], 2
          %454 = sst [smem:[%s453]] %s452
        $region64: #{tpu_custom_call.1} parent=47 // pred_fallthru
          _
        // Predicated region
        $region65: #{tpu_custom_call.1} parent=47 // pred_check
          %p455 = pneg %p216
        $region66: #{tpu_custom_call.1} parent=47 // pred_check_branch
          %457 = sbr.rel (%p455) target = $region68
        $region67: #{tpu_custom_call.1} parent=47 // pred_region
          %s459 = ssub.s32 16, 16
          %460 = vsyncadd [#allocation5], %s459
          %463 = dma.smem_to_hbm [#allocation8], 16, %s7, [#allocation5]
        $region68: #{tpu_custom_call.1} parent=47 // pred_fallthru
          _
        // Predicated region
        $region69: #{tpu_custom_call.1} parent=47 // pred_check
          %p464 = pneg %p216
        $region70: #{tpu_custom_call.1} parent=47 // pred_check_branch
          %466 = sbr.rel (%p464) target = $region72
        $region71: #{tpu_custom_call.1} parent=47 // pred_region
          %467 = dma.done [#allocation5], 16
        $region72: #{tpu_custom_call.1} parent=47 // pred_fallthru
          _
        %468 = sfence
      $region48: #{tpu_custom_call.1} parent=5 // pred_fallthru
        _
      %p469 = scmp.le.s32.totalorder 2, %s20
      // Predicated region
      $region73: #{tpu_custom_call.1} parent=5 // pred_check
        %p470 = pneg %p469
      $region74: #{tpu_custom_call.1} parent=5 // pred_check_branch
        %472 = sbr.rel (%p470) target = $region76
      $region75: #{tpu_custom_call.1} parent=5 // pred_region
        %s473 = ssub.s32 %s20, 2
      $region76: #{tpu_custom_call.1} parent=5 // pred_fallthru
        _
    $region6: #{tpu_custom_call.1} parent=1 // loop_footer
      %s24 = sadd.s32 1, %s20
    $region7: #{tpu_custom_call.1} parent=1 // loop_footer_branch
      %19 = sbr.rel target = $region3
    $region8: #{tpu_custom_call.1} parent=1 // loop_exit
      _
    %474 = vsyncpa [#allocation4], 1
    %s475 = scalar_lea.sflag [#allocation4], 1
    %476 = vsyncpa %s475, 1
    %477 = vsyncpa [#allocation7], 1
    %s478 = scalar_lea.sflag [#allocation7], 1
    %479 = vsyncpa %s478, 1
    %480 = vsyncpa [#allocation5], 1
    %s481 = scalar_lea.sflag [#allocation5], 1
    %482 = vsyncpa %s481, 1

</llo_original>
